<compile_context>
chip_gen: v7x
topology: tpu7x:2x2x1
jax: 0.10.0
libtpu: 0.0.40
codegen_flags: <defaults>
</compile_context>

<pallas_src>
import functools

import jax
import jax.numpy as jnp
from jax.experimental import pallas as pl
from jax.experimental.pallas import tpu as pltpu

_MIB = 1024 * 1024
_NEG_INF = float("-inf")


def _cdiv(a, b):
    return (a + b - 1) // b


def _round_up(a, b):
    return ((a + b - 1) // b) * b


# ---------------------------------------------------------------------------
# Kernels
# ---------------------------------------------------------------------------

def _masked_max_kernel(x_ref, m_ref, o_ref, *, tail_rows):
    # x_ref: (tb, tl, td), m_ref: (tb, tl, 1) in x.dtype, o_ref: (tb, td) accumulator.
    l = pl.program_id(2)

    def _accumulate(tile_max):
        @pl.when(l == 0)
        def _():
            o_ref[...] = tile_max

        @pl.when(l != 0)
        def _():
            o_ref[...] = jnp.maximum(o_ref[...], tile_max)

    def _compute(row_limit):
        x = x_ref[...]
        keep = m_ref[...] != 0                      # (tb, tl, 1): lane-broadcasts over td
        if row_limit is not None:                   # last (clamped) sequence block only
            rows = jax.lax.broadcasted_iota(jnp.int32, x.shape, 1)
            keep = jnp.logical_and(keep, rows < row_limit)
        # Scalar -inf (no (tb,tl,td) splat).  Select (not add) keeps torch's
        # masked_fill NaN semantics and neutralizes garbage in clamped blocks.
        _accumulate(jnp.max(jnp.where(keep, x, _NEG_INF), axis=1))

    if tail_rows is None:
        _compute(None)
    else:
        last = pl.num_programs(2) - 1

        @pl.when(l < last)
        def _():
            _compute(None)

        @pl.when(l == last)
        def _():
            _compute(tail_rows)


def _unmasked_max_kernel(x_ref, o_ref, *, tail_rows):
    # Specialized mask=None path: no mask DMA, no select in the hot loop.
    l = pl.program_id(2)

    def _accumulate(tile_max):
        @pl.when(l == 0)
        def _():
            o_ref[...] = tile_max

        @pl.when(l != 0)
        def _():
            o_ref[...] = jnp.maximum(o_ref[...], tile_max)

    if tail_rows is None:
        _accumulate(jnp.max(x_ref[...], axis=1))
    else:
        last = pl.num_programs(2) - 1

        @pl.when(l < last)
        def _():
            _accumulate(jnp.max(x_ref[...], axis=1))

        @pl.when(l == last)
        def _():
            x = x_ref[...]
            rows = jax.lax.broadcasted_iota(jnp.int32, x.shape, 1)
            _accumulate(jnp.max(jnp.where(rows < tail_rows, x, _NEG_INF), axis=1))


# ---------------------------------------------------------------------------
# Generation-aware sizing
# ---------------------------------------------------------------------------

def _vmem_limit_bytes():
    """Scoped-VMEM limit derived from the chip (48 MiB on 128-MiB-VMEM v5e/v6e,
    32 MiB on v7x's 64 MiB per-TC VMEM); conservative fallback if unknown."""
    cap = None
    try:
        cap = int(getattr(pltpu.get_tpu_info(), "vmem_capacity_bytes", 0)) or None
    except Exception:
        cap = None
    if cap is None:
        return 32 * _MIB
    return max(16 * _MIB, min(cap // 2, 48 * _MIB))


def _num_tensorcores():
    """Best-effort TensorCore-per-chip count (2 on v7x); never raises."""
    try:
        info = pltpu.get_tpu_info()
        for name in ("num_cores", "core_count", "num_tensorcores"):
            n = getattr(info, name, None)
            if n:
                return int(n)
    except Exception:
        pass
    try:
        n = getattr(jax.devices()[0], "num_cores", None)
        if n:
            return int(n)
    except Exception:
        pass
    return 1


def _hidden_tile_candidates(D):
    cands = [D]
    for c in sorted({D // 2, D // 4, 1024, 512, 256, 128}, reverse=True):
        if 0 < c < D and c % 128 == 0 and D % c == 0:
            cands.append(c)
    return cands


def _pick_tiles(B, L, D, itemsize, with_mask, limit_bytes, num_cores, seq_tile):
    sub = max(8, 32 // itemsize)            # sublane pack: 8 for f32, 16 for bf16
    tb = B if B <= sub else sub             # ragged batch tail handled by clamping
    nb = _cdiv(B, tb)

    budget = max(limit_bytes - 4 * _MIB, 2 * _MIB)   # headroom for internal scratch
    # (tb, tl, 1) mask block is lane-padded to 128 in VMEM; double-buffered.
    mask_row_bytes = 2 * tb * 128 * itemsize if with_mask else 0

    def tl_for(td):
        fixed = 2 * tb * td * itemsize                       # output block (dbl-buffered)
        per_row = 2 * tb * td * itemsize + mask_row_bytes    # x (dbl-buffered) + mask
        return (budget - fixed) // per_row

    cands = _hidden_tile_candidates(D)
    td = cands[0]

    # Multi-TensorCore chips (v7x): guarantee >= 2 parallel grid units so
    # megacore sharding has work to split; single-TC chips keep td = D.
    if num_cores >= 2 and nb == 1 and len(cands) > 1:
        td = cands[1]

    # VMEM-driven split: prefer the widest hidden tile whose sequence tile
    # still reaches the ~512-row HBM-roofline knee; else the widest that fits.
    target_tl = min(_round_up(max(L, 1), sub), 512)
    viable = [c for c in cands if c <= td and tl_for(c) >= sub]
    good = [c for c in viable if tl_for(c) >= target_tl]
    if good:
        td = good[0]
    elif viable:
        td = viable[0]
    else:
        td = cands[-1]          # pathological width; narrowest block we can form

    tl_max = max(sub, (min(tl_for(td), _round_up(L, sub)) // sub) * sub)
    if seq_tile is not None:
        tl_max = min(tl_max, max(sub, _round_up(seq_tile, sub)))

    if tl_max >= L:
        tl, n_l = L, 1
    else:
        n_l = _cdiv(L, tl_max)
        tl = _round_up(_cdiv(L, n_l), sub)   # balanced tiles: tail waste < sub rows
        n_l = _cdiv(L, tl)

    tail = L - (n_l - 1) * tl
    tail_rows = None if tail == tl else int(tail)
    return tb, td, tl, n_l, tail_rows


# ---------------------------------------------------------------------------
# Wrapper
# ---------------------------------------------------------------------------

def global_max_1d(x, mask=None, *, seq_tile=None):
    """Pallas equivalent of GlobalMax1D(dim=1).forward(x, mask).

    x:    [B, L, D] floating-point array
    mask: optional [B, L] boolean array; False positions are treated as -inf
          (rows with an all-False mask produce -inf, matching the reference)
    returns [B, D]
    """
    if not jnp.issubdtype(x.dtype, jnp.floating):
        raise TypeError("global_max_1d requires a floating-point input")
    B, L, D = x.shape
    itemsize = jnp.dtype(x.dtype).itemsize
    with_mask = mask is not None

    limit = _vmem_limit_bytes()
    cores = _num_tensorcores()
    tb, td, tl, n_l, tail_rows = _pick_tiles(
        B, L, D, itemsize, with_mask, limit, cores, seq_tile)

    grid = (_cdiv(B, tb), D // td, n_l)

    x_spec = pl.BlockSpec((tb, tl, td), lambda b, d, l: (b, l, d))
    o_spec = pl.BlockSpec((tb, td), lambda b, d, l: (b, d))

    common = dict(
        out_shape=jax.ShapeDtypeStruct((B, D), x.dtype),
        compiler_params=pltpu.CompilerParams(
            dimension_semantics=("parallel", "parallel", "arbitrary"),
            vmem_limit_bytes=limit,
        ),
        cost_estimate=pl.CostEstimate(
            flops=B * L * D,
            transcendentals=0,
            bytes_accessed=(B * L * D + B * D) * itemsize
            + (B * L * itemsize if with_mask else 0),
        ),
    )

    if with_mask:
        # Mask carried in x.dtype as a (B, L, 1) array (no padding of x, no int32).
        mask_x = mask.astype(x.dtype)[:, :, None]
        m_spec = pl.BlockSpec((tb, tl, 1), lambda b, d, l: (b, l, 0))
        kernel = functools.partial(_masked_max_kernel, tail_rows=tail_rows)
        return pl.pallas_call(
            kernel,
            grid_spec=pltpu.PrefetchScalarGridSpec(
                num_scalar_prefetch=0, grid=grid,
                in_specs=[x_spec, m_spec], out_specs=o_spec),
            **common,
        )(x, mask_x)

    kernel = functools.partial(_unmasked_max_kernel, tail_rows=tail_rows)
    return pl.pallas_call(
        kernel,
        grid_spec=pltpu.PrefetchScalarGridSpec(
            num_scalar_prefetch=0, grid=grid,
            in_specs=[x_spec], out_specs=o_spec),
        **common,
    )(x)


def _reference(x, mask=None):
    if mask is not None:
        x = jnp.where(mask[..., None], x, -jnp.inf)
    return jnp.max(x, axis=1)


if __name__ == "__main__":
    key = jax.random.PRNGKey(0)
    kx, km, kx2, km2 = jax.random.split(key, 4)

    # Small shapes matching the module's (N, L, C) convention.
    B, L, D = 2, 8, 32
    x = jax.random.normal(kx, (B, L, D), dtype=jnp.float32)
    mask = jax.random.bernoulli(km, p=0.7, shape=(B, L))
    mask = mask.at[:, 0].set(True)            # at least one valid position per row

    # Masked path.
    out = jax.block_until_ready(global_max_1d(x, mask))
    ref = _reference(x, mask)
    assert out.shape == (B, D)
    assert jnp.allclose(out, ref), "masked output mismatch"

    # Specialized unmasked path (no mask tensor, no select in the kernel).
    out2 = jax.block_until_ready(global_max_1d(x, None))
    assert jnp.allclose(out2, _reference(x, None)), "unmasked output mismatch"

    # Multi-step sequence accumulator + ragged L tail (iota mask) + ragged batch
    # tail (clamped boundary blocks) -- no padding of x anywhere.
    B2, L2, D2 = 10, 20, 32
    x2 = jax.random.normal(kx2, (B2, L2, D2), dtype=jnp.float32)
    mask2 = jax.random.bernoulli(km2, p=0.6, shape=(B2, L2)).at[:, 0].set(True)
    out3 = jax.block_until_ready(global_max_1d(x2, mask2, seq_tile=8))
    assert jnp.allclose(out3, _reference(x2, mask2)), "ragged masked output mismatch"
    out4 = jax.block_until_ready(global_max_1d(x2, None, seq_tile=8))
    assert jnp.allclose(out4, _reference(x2, None)), "ragged unmasked output mismatch"

    print("KERNEL_OK")
</pallas_src>

<mosaic_0001>
module attributes {stable_mosaic.version = 11 : i64} {
  func.func @_masked_max_kernel(%arg0: i32, %arg1: i32, %arg2: i32, %arg3: memref<2x8x32xf32, #tpu.memory_space<vmem>>, %arg4: memref<2x8x1xf32, #tpu.memory_space<vmem>>, %arg5: memref<2x32xf32, #tpu.memory_space<vmem>>) attributes {dimension_semantics = [#tpu.dimension_semantics<parallel>, #tpu.dimension_semantics<parallel>, #tpu.dimension_semantics<arbitrary>], iteration_bounds = array<i64: 1, 1, 1>, scalar_prefetch = 0 : i64, scratch_operands = 0 : i64, tpu.core_type = #tpu.core_type<tc>, window_params = [{transform_indices = @transform_0, window_bounds = array<i64: 2, 8, 32>}, {transform_indices = @transform_1, window_bounds = array<i64: 2, 8, 1>}, {transform_indices = @transform_2, window_bounds = array<i64: 2, 32>}]} {
    %c0 = arith.constant 0 : index
    %c0_0 = arith.constant 0 : index
    %c0_1 = arith.constant 0 : index
    %0 = vector.load %arg3[%c0, %c0_0, %c0_1] : memref<2x8x32xf32, #tpu.memory_space<vmem>>, vector<2x8x32xf32>
    %c0_2 = arith.constant 0 : index
    %c0_3 = arith.constant 0 : index
    %c0_4 = arith.constant 0 : index
    %1 = vector.load %arg4[%c0_2, %c0_3, %c0_4] : memref<2x8x1xf32, #tpu.memory_space<vmem>>, vector<2x8x1xf32>
    %cst = arith.constant 0.000000e+00 : f32
    %2 = vector.broadcast %cst : f32 to vector<2x8x1xf32>
    %3 = arith.cmpf one, %1, %2 : vector<2x8x1xf32>
    %cst_5 = arith.constant 0xFF800000 : f32
    %4 = vector.shape_cast %3 : vector<2x8x1xi1> to vector<2x8x1xi1>
    %5 = vector.broadcast %4 : vector<2x8x1xi1> to vector<2x8x32xi1>
    %6 = vector.broadcast %cst_5 : f32 to vector<2x8x32xf32>
    %7 = arith.select %5, %0, %6 : vector<2x8x32xi1>, vector<2x8x32xf32>
    %cst_6 = arith.constant dense<0xFF800000> : vector<2x32xf32>
    %8 = vector.multi_reduction <maximumf>, %7, %cst_6 [1] : vector<2x8x32xf32> to vector<2x32xf32>
    %c0_i32 = arith.constant 0 : i32
    %9 = arith.cmpi eq, %arg2, %c0_i32 : i32
    %10 = arith.extui %9 : i1 to i32
    %c0_i32_7 = arith.constant 0 : i32
    %11 = arith.cmpi ne, %10, %c0_i32_7 : i32
    scf.if %11 {
      %c0_10 = arith.constant 0 : index
      %c0_11 = arith.constant 0 : index
      %15 = vector.load %arg5[%c0_10, %c0_11] : memref<2x32xf32, #tpu.memory_space<vmem>>, vector<2x32xf32>
      tpu.vector_store %arg5[%c0_10, %c0_11], %8 {strides = array<i32>} : memref<2x32xf32, #tpu.memory_space<vmem>>, vector<2x32xf32>,
    } else {
    }
    %c0_i32_8 = arith.constant 0 : i32
    %12 = arith.cmpi ne, %arg2, %c0_i32_8 : i32
    %13 = arith.extui %12 : i1 to i32
    %c0_i32_9 = arith.constant 0 : i32
    %14 = arith.cmpi ne, %13, %c0_i32_9 : i32
    scf.if %14 {
      %c0_10 = arith.constant 0 : index
      %c0_11 = arith.constant 0 : index
      %15 = vector.load %arg5[%c0_10, %c0_11] : memref<2x32xf32, #tpu.memory_space<vmem>>, vector<2x32xf32>
      %16 = arith.maximumf %15, %8 : vector<2x32xf32>
      %c0_12 = arith.constant 0 : index
      %c0_13 = arith.constant 0 : index
      %17 = vector.load %arg5[%c0_12, %c0_13] : memref<2x32xf32, #tpu.memory_space<vmem>>, vector<2x32xf32>
      tpu.vector_store %arg5[%c0_12, %c0_13], %16 {strides = array<i32>} : memref<2x32xf32, #tpu.memory_space<vmem>>, vector<2x32xf32>,
    } else {
    }
    return
  }
  func.func @transform_0(%arg0: i32, %arg1: i32, %arg2: i32) -> (i32, i32, i32) {
    %c0_i32 = arith.constant 0 : i32
    return %arg0, %arg2, %arg1 : i32, i32, i32
  }
  func.func @transform_1(%arg0: i32, %arg1: i32, %arg2: i32) -> (i32, i32, i32) {
    %c0_i32 = arith.constant 0 : i32
    %c0_i32_0 = arith.constant 0 : i32
    return %arg0, %arg2, %c0_i32 : i32, i32, i32
  }
  func.func @transform_2(%arg0: i32, %arg1: i32, %arg2: i32) -> (i32, i32) {
    %c0_i32 = arith.constant 0 : i32
    return %arg0, %arg1 : i32, i32
  }
}

</mosaic_0001>

<llo_original>
// kernel: tpu_custom_call.1
$region0: #{tpu_custom_call.1}
  #allocation0 [shape = 'u32[]', space=smem, size = 0x4, offset = 0x4, fixed_abs, tag = 'smem constant byte address 0x4 - core index']
  #allocation1 [shape = 'u32[144,128]{1,0:T(1,128)}', space=vmem, size = 0x12000, scoped, tag = 'internal scratch']
  %s0 = inlined_call_operand.vmem [shape: f32[2,8,32], index: 0, kind: input, shape index: {}]
  %s1 = inlined_call_operand.vmem [shape: f32[2,8,1], index: 1, kind: input, shape index: {}]
  %s2 = inlined_call_operand.hbm [shape: f32[2,32], index: 2, kind: output, shape index: {}]
  %s3 = sld [smem:[#allocation0]]
  $region26: #{tpu_custom_call.1} parent=0
    _
  %s5 = ssub.s32 1, %s3
  %s6 = scalar_select 0, %s5, %s3
  $region1: #{tpu_custom_call.1} parent=0
    #allocation2 [shape = 'u8[1024]{0}', space=vmem, size = 0x400, scoped, tag = 'output window, operand 0, single buffered']
    #allocation3 [shape = 's32[1]{0}', space=sflag, size = 0x4, scoped, tag = 'scoped memory for tpu_custom_call.1']
    %7 = vsyncpa [#allocation3], 0
    // Predicated region
    $region2: #{tpu_custom_call.1} parent=1 // pred_check
      _
    $region3: #{tpu_custom_call.1} parent=1 // pred_check_branch
      %9 = sbr.rel (0) target = $region5
    $region4: #{tpu_custom_call.1} parent=1 // pred_region
      _
    $region5: #{tpu_custom_call.1} parent=1 // pred_fallthru
      _
    // Predicated region
    $region6: #{tpu_custom_call.1} parent=1 // pred_check
      _
    $region7: #{tpu_custom_call.1} parent=1 // pred_check_branch
      %11 = sbr.rel (0) target = $region9
    $region8: #{tpu_custom_call.1} parent=1 // pred_region
      _
    $region9: #{tpu_custom_call.1} parent=1 // pred_fallthru
      _
    %v12 = vld [vmem:[%s0] sm:$0xff]
    %v13 = vld [vmem:[%s0 + $0x8] sm:$0xff]
    %v14 = vld [vmem:[%s1] sm:$0xff]
    %v15 = vld [vmem:[%s1 + $0x8] sm:$0xff]
    %vm16 = vcmp.ne.f32.partialorder %v14, 0.0
    %vm17 = vcmp.ne.f32.partialorder %v15, 0.0
    %v18 = vsel %vm16, 1, 0
    %v19 = vsel %vm17, 1, 0
    %20 = vset.pattern.permute.xlu0 0
    %21 = vperm.xlu0 %20, %v18
    %v22 = vpop.permute.xlu0 %21
    %23 = vset.pattern.permute.xlu0 0
    %24 = vperm.xlu0 %23, %v19
    %v25 = vpop.permute.xlu0 %24
    %vm26 = vcmp.eq.s32.totalorder %v22, 1
    %vm27 = vcmp.eq.s32.totalorder %v25, 1
    %v28 = vsel %vm26, %v12, -inf
    %v29 = vsel %vm27, %v13, -inf
    %vm30 = vcmask 261120
    %v31 = vsel %vm30, %v28, -inf
    %v32 = vrot.slane %v31, 4
    %v33 = vmax.f32 %v31, %v32
    %v34 = vrot.slane %v33, 2
    %v35 = vmax.f32 %v33, %v34
    %v36 = vrot.slane %v35, 1
    %v37 = vmax.f32 %v35, %v36
    %v38 = vsel %vm30, %v29, -inf
    %v39 = vrot.slane %v38, 4
    %v40 = vmax.f32 %v38, %v39
    %v41 = vrot.slane %v40, 2
    %v42 = vmax.f32 %v40, %v41
    %v43 = vrot.slane %v42, 1
    %v44 = vmax.f32 %v42, %v43
    %p45 = scmp.eq.s32.totalorder 0, 0
    // Predicated region
    $region10: #{tpu_custom_call.1} parent=1 // pred_check
      %p46 = pneg %p45
    $region11: #{tpu_custom_call.1} parent=1 // pred_check_branch
      %48 = sbr.rel (%p46) target = $region13
    $region12: #{tpu_custom_call.1} parent=1 // pred_region
      %vm51 = vcmask 1041409
      %v52 = vsel %vm51, %v44, %v37
      %vm54 = vcmask 254976
      %55 = vst.msk [vmem:[#allocation2] sm:$0x3] %vm54, %v52
    $region13: #{tpu_custom_call.1} parent=1 // pred_fallthru
      _
    %p56 = scmp.ne.s32.totalorder 0, 0
    // Predicated region
    $region14: #{tpu_custom_call.1} parent=1 // pred_check
      %p57 = pneg %p56
    $region15: #{tpu_custom_call.1} parent=1 // pred_check_branch
      %59 = sbr.rel (%p57) target = $region17
    $region16: #{tpu_custom_call.1} parent=1 // pred_region
      %v60 = vld [vmem:[#allocation2] sm:$0x3]
      %vm63 = vcmask 1041409
      %v64 = vsel %vm63, %v44, %v37
      %v66 = vmax.f32 %v60, %v64
      %vm67 = vcmask 254976
      %68 = vst.msk [vmem:[#allocation2] sm:$0x3] %vm67, %v66
    $region17: #{tpu_custom_call.1} parent=1 // pred_fallthru
      _
    // Predicated region
    $region18: #{tpu_custom_call.1} parent=1 // pred_check
      _
    $region19: #{tpu_custom_call.1} parent=1 // pred_check_branch
      %70 = sbr.rel (0) target = $region21
    $region20: #{tpu_custom_call.1} parent=1 // pred_region
      %s72 = ssub.s32 32, 32
      %73 = vsyncadd [#allocation3], %s72
      %s75 = sshll.u32 [#allocation2], 4
      %s76 = int_to_ptr.vmem [resolvable:$true] %s75
      %78 = dma.vmem_to_hbm [thread:$0]  %s76, 32, %s2, [#allocation3]
    $region21: #{tpu_custom_call.1} parent=1 // pred_fallthru
      _
    // Predicated region
    $region22: #{tpu_custom_call.1} parent=1 // pred_check
      _
    $region23: #{tpu_custom_call.1} parent=1 // pred_check_branch
      %80 = sbr.rel (0) target = $region25
    $region24: #{tpu_custom_call.1} parent=1 // pred_region
      %81 = dma.done [#allocation3], 32
    $region25: #{tpu_custom_call.1} parent=1 // pred_fallthru
      _
    %82 = vsyncpa [#allocation3], 1

</llo_original>
